<compile_context>
chip_gen: v7x
topology: tpu7x:2x2x1
jax: 0.10.0
libtpu: 0.0.40
codegen_flags: <defaults>
</compile_context>

<pallas_src>
import jax
import jax.numpy as jnp
from jax import lax
from jax.experimental import pallas as pl
from jax.experimental.pallas import tpu as pltpu

_LANE = 128
_SUB = 8
_VMEM_LIMIT = 32 * 1024 * 1024


def _choose_tile_rows(rows):
    for cand in (2048, 1024, 512, 256, 128, 64, 32, 16, 8):
        if rows >= cand:
            return cand
    return 8


# ---------------------------------------------------------------------------
# Kernel factory
# ---------------------------------------------------------------------------
def _make_bmf_kernel(num, n_valid, tile_r, *, emit_gs, emit_pen, emit_loss,
                     mse_scale=0.0):
    """One streamed (tile_r, 128) pass: forward, penalties, fused loss tile-sum.

    Kernel args (in order): offs_ref (SMEM, int32[num]), prm_ref (SMEM,
    f32[4*num] = [Em | i0 | k | b]), Q, VPD, [gsw], then the requested outputs.
    """

    def kernel(offs_ref, prm_ref, *refs):
        pos = 0
        q = refs[pos][...]; pos += 1
        d = refs[pos][...]; pos += 1
        if emit_loss:
            gsw = refs[pos][...]; pos += 1
        out_refs = refs[pos:]

        # ---- in-kernel repeat_interleave: per-curve params -> per-point ----
        base = pl.program_id(0) * (tile_r * _LANE)
        idx = (base
               + lax.broadcasted_iota(jnp.int32, (tile_r, _LANE), 0) * _LANE
               + lax.broadcasted_iota(jnp.int32, (tile_r, _LANE), 1))

        em = jnp.zeros((tile_r, _LANE), jnp.float32)
        i0 = jnp.zeros((tile_r, _LANE), jnp.float32)
        k = jnp.zeros((tile_r, _LANE), jnp.float32)
        b = jnp.zeros((tile_r, _LANE), jnp.float32)
        for c in range(num):                      # static loop, num is tiny
            m = idx >= offs_ref[c]                # offs_ref[0] == 0
            em = jnp.where(m, prm_ref[0 * num + c], em)
            i0 = jnp.where(m, prm_ref[1 * num + c], i0)
            k = jnp.where(m, prm_ref[2 * num + c], k)
            b = jnp.where(m, prm_ref[3 * num + c], b)

        # ---- BMF forward ----
        q_i0 = q + i0                    # Q + i0_r
        q_i0_d = q_i0 * d                # Q_io_t_D
        bq = b * q
        s = bq + k + q_i0_d              # Q_br_k_io_D_sum
        inv = 1.0 / s
        em_inv = em * inv
        gs = em_inv * q_i0

        opos = 0
        if emit_gs:
            out_refs[opos][...] = gs
            opos += 1

        # ---- getpenalties ----
        if emit_pen or emit_loss:
            em_inv2 = em_inv * inv
            dq = em_inv2 * (k + bq + q_i0_d - q_i0 * (b + d))
            dd = -(em_inv2 * q_i0 * q_i0)
            d2q = -(2.0 * em_inv2 * inv) * ((k - i0 * b) * (b + d))

        if emit_pen:
            out_refs[opos][...] = dq
            out_refs[opos + 1][...] = dd
            out_refs[opos + 2][...] = d2q
            opos += 3

        # ---- fused lossSC epilogue: per-tile partial sum, no carried acc ----
        if emit_loss:
            diff = gs - gsw
            contrib = (mse_scale * (diff * diff)   # 10 * MSE (scale folded in)
                       - jnp.minimum(dq, 0.0)      # relu(-dgs_dQ)
                       + jnp.maximum(dd, 0.0)      # relu(dgs_dD)
                       + jnp.maximum(d2q, 0.0))    # relu(d2gs_dQ2)
            contrib = jnp.where(idx < n_valid, contrib, 0.0)   # mask padding
            partial = contrib.reshape(tile_r // _SUB, _SUB, _LANE).sum(axis=0)
            out_refs[opos][...] = partial[None]

    return kernel


# ---------------------------------------------------------------------------
# Wrappers
# ---------------------------------------------------------------------------
def _prepare_inputs(Q, VPD, gsw=None):
    # TODO(synk): produce inputs pre-padded to (rows_p, 128) upstream to avoid
    # this pad+reshape materialization entirely.
    Q = jnp.asarray(Q, jnp.float32)
    VPD = jnp.asarray(VPD, jnp.float32)
    N = Q.shape[0]
    rows = (N + _LANE - 1) // _LANE
    tile_r = _choose_tile_rows(rows)
    rows_p = ((rows + tile_r - 1) // tile_r) * tile_r
    pad = rows_p * _LANE - N

    def pad2d(x, fill):
        return jnp.pad(x, (0, pad), constant_values=fill).reshape(rows_p, _LANE)

    streams = [pad2d(Q, 0.0), pad2d(VPD, 1.0)]
    if gsw is not None:
        streams.append(pad2d(jnp.asarray(gsw, jnp.float32), 0.0))
    return streams, N, rows_p, tile_r


def _prefetch_args(Em, i0, k, b, lengths):
    lengths = jnp.asarray(lengths, jnp.int32)
    offs = jnp.concatenate([jnp.zeros((1,), jnp.int32),
                            jnp.cumsum(lengths)[:-1].astype(jnp.int32)])
    prm = jnp.concatenate([jnp.asarray(p, jnp.float32).reshape(-1)
                           for p in (Em, i0, k, b)])
    return offs, prm


def _call(kernel, streams, out_shapes, out_specs, rows_p, tile_r, offs, prm):
    num_tiles = rows_p // tile_r
    spec = pl.BlockSpec((tile_r, _LANE), lambda i, *_: (i, 0))
    return pl.pallas_call(
        kernel,
        grid_spec=pltpu.PrefetchScalarGridSpec(
            num_scalar_prefetch=2,
            grid=(num_tiles,),
            in_specs=[spec] * len(streams),
            out_specs=list(out_specs)),
        out_shape=tuple(out_shapes),
        compiler_params=pltpu.CompilerParams(
            dimension_semantics=("parallel",),
            vmem_limit_bytes=_VMEM_LIMIT),
    )(offs, prm, *streams)


def bmf_forward(Q, VPD, Em, i0, k, b, lengths):
    """Exact equivalent of BMF.forward() -> gs of shape (N,). gs-only kernel."""
    streams, N, rows_p, tile_r = _prepare_inputs(Q, VPD)
    offs, prm = _prefetch_args(Em, i0, k, b, lengths)
    num = int(jnp.asarray(Em).shape[0])
    spec = pl.BlockSpec((tile_r, _LANE), lambda i, *_: (i, 0))
    big = jax.ShapeDtypeStruct((rows_p, _LANE), jnp.float32)
    kernel = _make_bmf_kernel(num, N, tile_r,
                              emit_gs=True, emit_pen=False, emit_loss=False)
    res = _call(kernel, streams, (big,), [spec], rows_p, tile_r, offs, prm)
    return res[0].reshape(-1)[:N]


def bmf_forward_and_penalties(Q, VPD, Em, i0, k, b, lengths):
    """Returns (gs, dgs_dQ, dgs_dD, d2gs_dQ2), each of shape (N,)."""
    streams, N, rows_p, tile_r = _prepare_inputs(Q, VPD)
    offs, prm = _prefetch_args(Em, i0, k, b, lengths)
    num = int(jnp.asarray(Em).shape[0])
    spec = pl.BlockSpec((tile_r, _LANE), lambda i, *_: (i, 0))
    big = jax.ShapeDtypeStruct((rows_p, _LANE), jnp.float32)
    kernel = _make_bmf_kernel(num, N, tile_r,
                              emit_gs=True, emit_pen=True, emit_loss=False)
    res = _call(kernel, streams, (big, big, big, big), [spec] * 4,
                rows_p, tile_r, offs, prm)
    unpad = lambda x: x.reshape(-1)[:N]
    return tuple(unpad(r) for r in res)


def _param_penalty(Em, i0, k, b):
    return sum(jnp.sum(jnp.maximum(-jnp.asarray(p, jnp.float32), 0.0))
               for p in (Em, i0, k, b))


def bmf_loss(Q, VPD, Em, i0, k, b, lengths, gsw):
    """Fused lossSC scalar only (MSE*10 + relu penalties); no big outputs."""
    streams, N, rows_p, tile_r = _prepare_inputs(Q, VPD, gsw)
    offs, prm = _prefetch_args(Em, i0, k, b, lengths)
    num = int(jnp.asarray(Em).shape[0])
    num_tiles = rows_p // tile_r
    part_shape = jax.ShapeDtypeStruct((num_tiles, _SUB, _LANE), jnp.float32)
    part_spec = pl.BlockSpec((1, _SUB, _LANE), lambda i, *_: (i, 0, 0))
    kernel = _make_bmf_kernel(num, N, tile_r, emit_gs=False, emit_pen=False,
                              emit_loss=True, mse_scale=10.0 / float(N))
    res = _call(kernel, streams, (part_shape,), [part_spec],
                rows_p, tile_r, offs, prm)
    return jnp.sum(res[0]) + _param_penalty(Em, i0, k, b)


def bmf_forward_with_loss(Q, VPD, Em, i0, k, b, lengths, gsw):
    """Returns (gs, loss): forward output plus fused lossSC scalar."""
    streams, N, rows_p, tile_r = _prepare_inputs(Q, VPD, gsw)
    offs, prm = _prefetch_args(Em, i0, k, b, lengths)
    num = int(jnp.asarray(Em).shape[0])
    num_tiles = rows_p // tile_r
    spec = pl.BlockSpec((tile_r, _LANE), lambda i, *_: (i, 0))
    big = jax.ShapeDtypeStruct((rows_p, _LANE), jnp.float32)
    part_shape = jax.ShapeDtypeStruct((num_tiles, _SUB, _LANE), jnp.float32)
    part_spec = pl.BlockSpec((1, _SUB, _LANE), lambda i, *_: (i, 0, 0))
    kernel = _make_bmf_kernel(num, N, tile_r, emit_gs=True, emit_pen=False,
                              emit_loss=True, mse_scale=10.0 / float(N))
    gs2, part = _call(kernel, streams, (big, part_shape), [spec, part_spec],
                      rows_p, tile_r, offs, prm)
    loss = jnp.sum(part) + _param_penalty(Em, i0, k, b)
    return gs2.reshape(-1)[:N], loss


# ---------------------------------------------------------------------------
# Demo / correctness check
# ---------------------------------------------------------------------------
if __name__ == "__main__":
    key = jax.random.PRNGKey(0)
    kq, kv, kw, ke, ki, kk, kb = jax.random.split(key, 7)

    num = 4
    lengths = jnp.array([40, 56, 36, 60], dtype=jnp.int32)
    N = int(jnp.sum(lengths))                      # 192 points total

    Q = jax.random.uniform(kq, (N,), jnp.float32, 0.0, 2000.0)
    VPD = jax.random.uniform(kv, (N,), jnp.float32, 0.5, 3.0)
    gsw = jax.random.uniform(kw, (N,), jnp.float32, 0.0, 0.5)

    Em = 1.0 + 0.1 * jax.random.normal(ke, (num,), jnp.float32)
    Em = Em.at[1].set(-0.05)                       # exercise penalty branches
    i0 = 10.0 + jax.random.normal(ki, (num,), jnp.float32)
    k = 10000.0 + 100.0 * jax.random.normal(kk, (num,), jnp.float32)
    b = 10.0 + jax.random.normal(kb, (num,), jnp.float32)

    gs_only = jax.block_until_ready(bmf_forward(Q, VPD, Em, i0, k, b, lengths))
    gs, dq, dd, d2q = bmf_forward_and_penalties(Q, VPD, Em, i0, k, b, lengths)
    gs = jax.block_until_ready(gs)
    gs_l, loss = bmf_forward_with_loss(Q, VPD, Em, i0, k, b, lengths, gsw)
    loss = jax.block_until_ready(loss)
    loss_only = jax.block_until_ready(
        bmf_loss(Q, VPD, Em, i0, k, b, lengths, gsw))

    # ---- plain-JAX reference of the exact torch semantics ----
    Em_r = jnp.repeat(Em, lengths, total_repeat_length=N)
    i0_r = jnp.repeat(i0, lengths, total_repeat_length=N)
    k_r = jnp.repeat(k, lengths, total_repeat_length=N)
    b_r = jnp.repeat(b, lengths, total_repeat_length=N)
    Q_i0 = Q + i0_r
    Q_io_t_D = Q_i0 * VPD
    S = b_r * Q + k_r + Q_io_t_D
    gs_ref = Em_r * Q_i0 / S
    dq_ref = Em_r * (k_r + b_r * Q + Q_io_t_D - Q_i0 * (b_r + VPD)) / S ** 2
    dd_ref = Em_r * -(Q_i0 ** 2) / S ** 2
    d2q_ref = -(2.0 * Em_r * (k_r - i0_r * b_r) * (b_r + VPD)) / S ** 3

    loss_ref = jnp.mean((gs_ref - gsw) ** 2) * 10.0
    loss_ref = loss_ref + sum(jnp.sum(jnp.maximum(-p, 0.0))
                              for p in (Em, i0, k, b))
    loss_ref = loss_ref + jnp.sum(jnp.maximum(-dq_ref, 0.0))
    loss_ref = loss_ref + jnp.sum(jnp.maximum(dd_ref, 0.0))
    loss_ref = loss_ref + jnp.sum(jnp.maximum(d2q_ref, 0.0))

    assert jnp.allclose(gs_only, gs_ref, rtol=1e-4, atol=1e-7), "gs-only mismatch"
    assert jnp.allclose(gs, gs_ref, rtol=1e-4, atol=1e-7), "gs mismatch"
    assert jnp.allclose(dq, dq_ref, rtol=1e-4, atol=1e-9), "dgs_dQ mismatch"
    assert jnp.allclose(dd, dd_ref, rtol=1e-4, atol=1e-9), "dgs_dD mismatch"
    assert jnp.allclose(d2q, d2q_ref, rtol=1e-4, atol=1e-11), "d2gs_dQ2 mismatch"
    assert jnp.allclose(gs_l, gs_ref, rtol=1e-4, atol=1e-7), "gs (loss) mismatch"
    assert jnp.allclose(loss, loss_ref, rtol=1e-4, atol=1e-6), (loss, loss_ref)
    assert jnp.allclose(loss_only, loss_ref, rtol=1e-4, atol=1e-6), (loss_only,
                                                                     loss_ref)

    print("KERNEL_OK")
</pallas_src>

<mosaic_0001>
module attributes {stable_mosaic.version = 11 : i64} {
  func.func @kernel(%arg0: i32, %arg1: memref<4xi32, #tpu.memory_space<smem>>, %arg2: memref<16xf32, #tpu.memory_space<smem>>, %arg3: memref<8x128xf32, #tpu.memory_space<vmem>>, %arg4: memref<8x128xf32, #tpu.memory_space<vmem>>, %arg5: memref<8x128xf32, #tpu.memory_space<vmem>>) attributes {dimension_semantics = [#tpu.dimension_semantics<parallel>], iteration_bounds = array<i64: 1>, scalar_prefetch = 2 : i64, scratch_operands = 0 : i64, tpu.core_type = #tpu.core_type<tc>, window_params = [{transform_indices = @transform_0, window_bounds = array<i64: 8, 128>}, {transform_indices = @transform_1, window_bounds = array<i64: 8, 128>}, {transform_indices = @transform_2, window_bounds = array<i64: 8, 128>}]} {
    %c0 = arith.constant 0 : index
    %c0_0 = arith.constant 0 : index
    %0 = vector.load %arg3[%c0, %c0_0] : memref<8x128xf32, #tpu.memory_space<vmem>>, vector<8x128xf32>
    %c0_1 = arith.constant 0 : index
    %c0_2 = arith.constant 0 : index
    %1 = vector.load %arg4[%c0_1, %c0_2] : memref<8x128xf32, #tpu.memory_space<vmem>>, vector<8x128xf32>
    %c1024_i32 = arith.constant 1024 : i32
    %2 = arith.muli %arg0, %c1024_i32 : i32
    %3 = tpu.iota {dimensions = array<i32: 0>} : vector<8x128xi32>
    %c128_i32 = arith.constant 128 : i32
    %4 = vector.broadcast %c128_i32 : i32 to vector<8x128xi32>
    %5 = arith.muli %3, %4 : vector<8x128xi32>
    %6 = vector.broadcast %2 : i32 to vector<8x128xi32>
    %7 = arith.addi %6, %5 : vector<8x128xi32>
    %8 = tpu.iota {dimensions = array<i32: 1>} : vector<8x128xi32>
    %9 = arith.addi %7, %8 : vector<8x128xi32>
    %cst = arith.constant 0.000000e+00 : f32
    %10 = vector.broadcast %cst : f32 to vector<8x128xf32>
    %cst_3 = arith.constant 0.000000e+00 : f32
    %11 = vector.broadcast %cst_3 : f32 to vector<8x128xf32>
    %cst_4 = arith.constant 0.000000e+00 : f32
    %12 = vector.broadcast %cst_4 : f32 to vector<8x128xf32>
    %cst_5 = arith.constant 0.000000e+00 : f32
    %13 = vector.broadcast %cst_5 : f32 to vector<8x128xf32>
    %c0_6 = arith.constant 0 : index
    %14 = memref.load %arg1[%c0_6] : memref<4xi32, #tpu.memory_space<smem>>
    %15 = vector.broadcast %14 : i32 to vector<8x128xi32>
    %16 = arith.cmpi sge, %9, %15 : vector<8x128xi32>
    %c0_7 = arith.constant 0 : index
    %17 = memref.load %arg2[%c0_7] : memref<16xf32, #tpu.memory_space<smem>>
    %18 = vector.broadcast %17 : f32 to vector<8x128xf32>
    %19 = arith.select %16, %18, %10 : vector<8x128xi1>, vector<8x128xf32>
    %c4 = arith.constant 4 : index
    %20 = memref.load %arg2[%c4] : memref<16xf32, #tpu.memory_space<smem>>
    %21 = vector.broadcast %20 : f32 to vector<8x128xf32>
    %22 = arith.select %16, %21, %11 : vector<8x128xi1>, vector<8x128xf32>
    %c8 = arith.constant 8 : index
    %23 = memref.load %arg2[%c8] : memref<16xf32, #tpu.memory_space<smem>>
    %24 = vector.broadcast %23 : f32 to vector<8x128xf32>
    %25 = arith.select %16, %24, %12 : vector<8x128xi1>, vector<8x128xf32>
    %c12 = arith.constant 12 : index
    %26 = memref.load %arg2[%c12] : memref<16xf32, #tpu.memory_space<smem>>
    %27 = vector.broadcast %26 : f32 to vector<8x128xf32>
    %28 = arith.select %16, %27, %13 : vector<8x128xi1>, vector<8x128xf32>
    %c1 = arith.constant 1 : index
    %29 = memref.load %arg1[%c1] : memref<4xi32, #tpu.memory_space<smem>>
    %30 = vector.broadcast %29 : i32 to vector<8x128xi32>
    %31 = arith.cmpi sge, %9, %30 : vector<8x128xi32>
    %c1_8 = arith.constant 1 : index
    %32 = memref.load %arg2[%c1_8] : memref<16xf32, #tpu.memory_space<smem>>
    %33 = vector.broadcast %32 : f32 to vector<8x128xf32>
    %34 = arith.select %31, %33, %19 : vector<8x128xi1>, vector<8x128xf32>
    %c5 = arith.constant 5 : index
    %35 = memref.load %arg2[%c5] : memref<16xf32, #tpu.memory_space<smem>>
    %36 = vector.broadcast %35 : f32 to vector<8x128xf32>
    %37 = arith.select %31, %36, %22 : vector<8x128xi1>, vector<8x128xf32>
    %c9 = arith.constant 9 : index
    %38 = memref.load %arg2[%c9] : memref<16xf32, #tpu.memory_space<smem>>
    %39 = vector.broadcast %38 : f32 to vector<8x128xf32>
    %40 = arith.select %31, %39, %25 : vector<8x128xi1>, vector<8x128xf32>
    %c13 = arith.constant 13 : index
    %41 = memref.load %arg2[%c13] : memref<16xf32, #tpu.memory_space<smem>>
    %42 = vector.broadcast %41 : f32 to vector<8x128xf32>
    %43 = arith.select %31, %42, %28 : vector<8x128xi1>, vector<8x128xf32>
    %c2 = arith.constant 2 : index
    %44 = memref.load %arg1[%c2] : memref<4xi32, #tpu.memory_space<smem>>
    %45 = vector.broadcast %44 : i32 to vector<8x128xi32>
    %46 = arith.cmpi sge, %9, %45 : vector<8x128xi32>
    %c2_9 = arith.constant 2 : index
    %47 = memref.load %arg2[%c2_9] : memref<16xf32, #tpu.memory_space<smem>>
    %48 = vector.broadcast %47 : f32 to vector<8x128xf32>
    %49 = arith.select %46, %48, %34 : vector<8x128xi1>, vector<8x128xf32>
    %c6 = arith.constant 6 : index
    %50 = memref.load %arg2[%c6] : memref<16xf32, #tpu.memory_space<smem>>
    %51 = vector.broadcast %50 : f32 to vector<8x128xf32>
    %52 = arith.select %46, %51, %37 : vector<8x128xi1>, vector<8x128xf32>
    %c10 = arith.constant 10 : index
    %53 = memref.load %arg2[%c10] : memref<16xf32, #tpu.memory_space<smem>>
    %54 = vector.broadcast %53 : f32 to vector<8x128xf32>
    %55 = arith.select %46, %54, %40 : vector<8x128xi1>, vector<8x128xf32>
    %c14 = arith.constant 14 : index
    %56 = memref.load %arg2[%c14] : memref<16xf32, #tpu.memory_space<smem>>
    %57 = vector.broadcast %56 : f32 to vector<8x128xf32>
    %58 = arith.select %46, %57, %43 : vector<8x128xi1>, vector<8x128xf32>
    %c3 = arith.constant 3 : index
    %59 = memref.load %arg1[%c3] : memref<4xi32, #tpu.memory_space<smem>>
    %60 = vector.broadcast %59 : i32 to vector<8x128xi32>
    %61 = arith.cmpi sge, %9, %60 : vector<8x128xi32>
    %c3_10 = arith.constant 3 : index
    %62 = memref.load %arg2[%c3_10] : memref<16xf32, #tpu.memory_space<smem>>
    %63 = vector.broadcast %62 : f32 to vector<8x128xf32>
    %64 = arith.select %61, %63, %49 : vector<8x128xi1>, vector<8x128xf32>
    %c7 = arith.constant 7 : index
    %65 = memref.load %arg2[%c7] : memref<16xf32, #tpu.memory_space<smem>>
    %66 = vector.broadcast %65 : f32 to vector<8x128xf32>
    %67 = arith.select %61, %66, %52 : vector<8x128xi1>, vector<8x128xf32>
    %c11 = arith.constant 11 : index
    %68 = memref.load %arg2[%c11] : memref<16xf32, #tpu.memory_space<smem>>
    %69 = vector.broadcast %68 : f32 to vector<8x128xf32>
    %70 = arith.select %61, %69, %55 : vector<8x128xi1>, vector<8x128xf32>
    %c15 = arith.constant 15 : index
    %71 = memref.load %arg2[%c15] : memref<16xf32, #tpu.memory_space<smem>>
    %72 = vector.broadcast %71 : f32 to vector<8x128xf32>
    %73 = arith.select %61, %72, %58 : vector<8x128xi1>, vector<8x128xf32>
    %74 = arith.addf %0, %67 : vector<8x128xf32>
    %75 = arith.mulf %74, %1 : vector<8x128xf32>
    %76 = arith.mulf %73, %0 : vector<8x128xf32>
    %77 = arith.addf %76, %70 : vector<8x128xf32>
    %78 = arith.addf %77, %75 : vector<8x128xf32>
    %cst_11 = arith.constant 1.000000e+00 : f32
    %79 = vector.broadcast %cst_11 : f32 to vector<8x128xf32>
    %80 = arith.divf %79, %78 : vector<8x128xf32>
    %81 = arith.mulf %64, %80 : vector<8x128xf32>
    %82 = arith.mulf %81, %74 : vector<8x128xf32>
    %c0_12 = arith.constant 0 : index
    %c0_13 = arith.constant 0 : index
    %83 = vector.load %arg5[%c0_12, %c0_13] : memref<8x128xf32, #tpu.memory_space<vmem>>, vector<8x128xf32>
    tpu.vector_store %arg5[%c0_12, %c0_13], %82 {strides = array<i32>} : memref<8x128xf32, #tpu.memory_space<vmem>>, vector<8x128xf32>,
    return
  }
  func.func @transform_0(%arg0: i32, %arg1: memref<4xi32, #tpu.memory_space<smem>>, %arg2: memref<16xf32, #tpu.memory_space<smem>>) -> (i32, i32) {
    %c0_i32 = arith.constant 0 : i32
    %c0_i32_0 = arith.constant 0 : i32
    return %arg0, %c0_i32 : i32, i32
  }
  func.func @transform_1(%arg0: i32, %arg1: memref<4xi32, #tpu.memory_space<smem>>, %arg2: memref<16xf32, #tpu.memory_space<smem>>) -> (i32, i32) {
    %c0_i32 = arith.constant 0 : i32
    %c0_i32_0 = arith.constant 0 : i32
    return %arg0, %c0_i32 : i32, i32
  }
  func.func @transform_2(%arg0: i32, %arg1: memref<4xi32, #tpu.memory_space<smem>>, %arg2: memref<16xf32, #tpu.memory_space<smem>>) -> (i32, i32) {
    %c0_i32 = arith.constant 0 : i32
    %c0_i32_0 = arith.constant 0 : i32
    return %arg0, %c0_i32 : i32, i32
  }
}

</mosaic_0001>

<llo_original>
// kernel: tpu_custom_call.1
$region0: #{tpu_custom_call.1}
  #allocation0 [shape = 'u32[]', space=smem, size = 0x4, offset = 0x4, fixed_abs, tag = 'smem constant byte address 0x4 - core index']
  #allocation1 [shape = 'u32[144,128]{1,0:T(1,128)}', space=vmem, size = 0x12000, scoped, tag = 'internal scratch']
  #allocation2 [shape = 's32[1]{0}', space=sflag, size = 0x4, scoped, tag = 'scoped memory for tpu_custom_call.1']
  #allocation3 [shape = 'u8[512]{0}', space=smem, size = 0x200, scoped, tag = 'prefetched SMEM operand 0']
  #allocation4 [shape = 'u8[512]{0}', space=smem, size = 0x200, scoped, tag = 'prefetched SMEM operand 1']
  %s0 = inlined_call_operand.hbm [shape: s32[4], index: 0, kind: input, shape index: {}]
  %s1 = inlined_call_operand.vmem [shape: f32[16], index: 1, kind: input, shape index: {}]
  %s2 = inlined_call_operand.hbm [shape: f32[8,128], index: 2, kind: input, shape index: {}]
  %s3 = inlined_call_operand.vmem [shape: f32[8,128], index: 3, kind: input, shape index: {}]
  %s4 = inlined_call_operand.hbm [shape: f32[8,128], index: 4, kind: output, shape index: {}]
  %s5 = sld [smem:[#allocation0]]
  $region22: #{tpu_custom_call.1} parent=0
    _
  %s7 = ssub.s32 1, %s5
  %s8 = scalar_select 0, %s7, %s5
  %10 = dma.hbm_to_smem %s0, 16, [#allocation3], [#allocation2]
  %s11 = sshll.u32 %s1, 4
  %s12 = int_to_ptr.vmem [resolvable:$true] %s11
  %14 = dma.vmem_to_smem %s12, 16, [#allocation4], [#allocation2]
  %15 = dma.done [#allocation2], 32
  %16 = sfence
  $region1: #{tpu_custom_call.1} parent=0
    #allocation5 [shape = 'u8[4096]{0}', space=vmem, size = 0x1000, scoped, tag = 'input window, operand 2, single buffered']
    #allocation6 [shape = 's32[1]{0}', space=sflag, size = 0x4, scoped, tag = 'scoped memory for tpu_custom_call.1']
    #allocation7 [shape = 's32[1]{0}', space=sflag, size = 0x4, scoped, tag = 'scoped memory for tpu_custom_call.1']
    #allocation8 [shape = 'u8[4096]{0}', space=vmem, size = 0x1000, scoped, tag = 'output window, operand 0, single buffered']
    %17 = vsyncpa [#allocation6], 0
    %18 = vsyncpa [#allocation7], 0
    // Predicated region
    $region2: #{tpu_custom_call.1} parent=1 // pred_check
      _
    $region3: #{tpu_custom_call.1} parent=1 // pred_check_branch
      %20 = sbr.rel (0) target = $region5
    $region4: #{tpu_custom_call.1} parent=1 // pred_region
      %s22 = ssub.s32 128, 128
      %23 = vsyncadd [#allocation6], %s22
      %s25 = sshll.u32 [#allocation5], 4
      %s26 = int_to_ptr.vmem [resolvable:$true] %s25
      %28 = dma.hbm_to_vmem [thread:$0]  %s2, 128, %s26, [#allocation6]
    $region5: #{tpu_custom_call.1} parent=1 // pred_fallthru
      _
    // Predicated region
    $region6: #{tpu_custom_call.1} parent=1 // pred_check
      _
    $region7: #{tpu_custom_call.1} parent=1 // pred_check_branch
      %30 = sbr.rel (0) target = $region9
    $region8: #{tpu_custom_call.1} parent=1 // pred_region
      _
    $region9: #{tpu_custom_call.1} parent=1 // pred_fallthru
      _
    // Predicated region
    $region10: #{tpu_custom_call.1} parent=1 // pred_check
      _
    $region11: #{tpu_custom_call.1} parent=1 // pred_check_branch
      %32 = sbr.rel (0) target = $region13
    $region12: #{tpu_custom_call.1} parent=1 // pred_region
      %33 = dma.done [#allocation6], 128
    $region13: #{tpu_custom_call.1} parent=1 // pred_fallthru
      _
    %v34 = vld [vmem:[#allocation5] sm:$0xff]
    %v35 = vld [vmem:[%s3] sm:$0xff]
    %s36 = smul.u32 0, 1024
    %v37 = vlaneseq
    %v38 = vshrl.u32 %v37, 7
    %v39 = vmul.u32 %v38, 128
    %v40 = vstv %s36
    %v41 = vadd.s32 %v40, %v39
    %v42 = vlaneseq
    %v43 = vand.u32 %v42, 127
    %v44 = vadd.s32 %v41, %v43
    %s45 = sld [smem:[#allocation3]]
    %v46 = vstv %s45
    %vm47 = vcmp.ge.s32.totalorder %v44, %v46
    %s48 = sld [smem:[#allocation4]]
    %v49 = vstv %s48
    %v50 = vsel %vm47, %v49, 0.0
    %s51 = sld [smem:[#allocation4 + $0x4]]
    %v52 = vstv %s51
    %v53 = vsel %vm47, %v52, 0.0
    %s54 = sld [smem:[#allocation4 + $0x8]]
    %v55 = vstv %s54
    %v56 = vsel %vm47, %v55, 0.0
    %s57 = sld [smem:[#allocation4 + $0xc]]
    %v58 = vstv %s57
    %v59 = vsel %vm47, %v58, 0.0
    %s60 = sld [smem:[#allocation3 + $0x1]]
    %v61 = vstv %s60
    %vm62 = vcmp.ge.s32.totalorder %v44, %v61
    %s63 = sld [smem:[#allocation4 + $0x1]]
    %v64 = vstv %s63
    %v65 = vsel %vm62, %v64, %v50
    %s66 = sld [smem:[#allocation4 + $0x5]]
    %v67 = vstv %s66
    %v68 = vsel %vm62, %v67, %v53
    %s69 = sld [smem:[#allocation4 + $0x9]]
    %v70 = vstv %s69
    %v71 = vsel %vm62, %v70, %v56
    %s72 = sld [smem:[#allocation4 + $0xd]]
    %v73 = vstv %s72
    %v74 = vsel %vm62, %v73, %v59
    %s75 = sld [smem:[#allocation3 + $0x2]]
    %v76 = vstv %s75
    %vm77 = vcmp.ge.s32.totalorder %v44, %v76
    %s78 = sld [smem:[#allocation4 + $0x2]]
    %v79 = vstv %s78
    %v80 = vsel %vm77, %v79, %v65
    %s81 = sld [smem:[#allocation4 + $0x6]]
    %v82 = vstv %s81
    %v83 = vsel %vm77, %v82, %v68
    %s84 = sld [smem:[#allocation4 + $0xa]]
    %v85 = vstv %s84
    %v86 = vsel %vm77, %v85, %v71
    %s87 = sld [smem:[#allocation4 + $0xe]]
    %v88 = vstv %s87
    %v89 = vsel %vm77, %v88, %v74
    %s90 = sld [smem:[#allocation3 + $0x3]]
    %v91 = vstv %s90
    %vm92 = vcmp.ge.s32.totalorder %v44, %v91
    %s93 = sld [smem:[#allocation4 + $0x3]]
    %v94 = vstv %s93
    %v95 = vsel %vm92, %v94, %v80
    %s96 = sld [smem:[#allocation4 + $0x7]]
    %v97 = vstv %s96
    %v98 = vsel %vm92, %v97, %v83
    %s99 = sld [smem:[#allocation4 + $0xb]]
    %v100 = vstv %s99
    %v101 = vsel %vm92, %v100, %v86
    %s102 = sld [smem:[#allocation4 + $0xf]]
    %v103 = vstv %s102
    %v104 = vsel %vm92, %v103, %v89
    %v105 = vadd.f32 %v34, %v98
    %v106 = vmul.f32 %v105, %v35
    %v107 = vmul.f32 %v104, %v34
    %v108 = vadd.f32 %v107, %v101
    %v109 = vadd.f32 %v108, %v106
    %v110 = vrcp.pop %v109
    %v111 = vmul.f32 1.0, %v110
    %v112 = vmul.f32 %v95, %v111
    %v113 = vmul.f32 %v112, %v105
    %114 = vst [vmem:[#allocation8] sm:$0xff] %v113
    // Predicated region
    $region14: #{tpu_custom_call.1} parent=1 // pred_check
      _
    $region15: #{tpu_custom_call.1} parent=1 // pred_check_branch
      %116 = sbr.rel (0) target = $region17
    $region16: #{tpu_custom_call.1} parent=1 // pred_region
      %s118 = ssub.s32 128, 128
      %119 = vsyncadd [#allocation7], %s118
      %s121 = sshll.u32 [#allocation8], 4
      %s122 = int_to_ptr.vmem [resolvable:$true] %s121
      %124 = dma.vmem_to_hbm [thread:$0]  %s122, 128, %s4, [#allocation7]
    $region17: #{tpu_custom_call.1} parent=1 // pred_fallthru
      _
    // Predicated region
    $region18: #{tpu_custom_call.1} parent=1 // pred_check
      _
    $region19: #{tpu_custom_call.1} parent=1 // pred_check_branch
      %126 = sbr.rel (0) target = $region21
    $region20: #{tpu_custom_call.1} parent=1 // pred_region
      %127 = dma.done [#allocation7], 128
    $region21: #{tpu_custom_call.1} parent=1 // pred_fallthru
      _
    %128 = vsyncpa [#allocation6], 1
    %129 = vsyncpa [#allocation7], 1

</llo_original>
